<compile_context>
chip_gen: v5e
topology: v5e:2x2
jax: 0.10.0
libtpu: 0.0.40
codegen_flags: <defaults>
</compile_context>

<pallas_src>
import jax
import jax.numpy as jnp
from jax.experimental import pallas as pl
from jax.experimental.pallas import tpu as pltpu


def _gather_logits(idx_block, table_block):
    """One-hot row gather on the MXU: logits[g, :] = table[idx[g], :] (f32)."""
    g = idx_block.shape[0]
    v_rows = table_block.shape[0]
    col = jax.lax.broadcasted_iota(jnp.int32, (g, v_rows), 1)
    one_hot = (col == idx_block).astype(table_block.dtype)          # (G, V)
    return jnp.dot(
        one_hot,
        table_block,
        preferred_element_type=jnp.float32,
        precision=jax.lax.Precision.HIGHEST,  # exact gather even for f32 tables
    )


def _embed_kernel(idx_ref, table_ref, logits_ref):
    """target=None path: pure embedding lookup."""
    logits_f32 = _gather_logits(idx_ref[...], table_ref[...])
    logits_ref[...] = logits_f32.astype(logits_ref.dtype)


def _embed_ce_kernel(idx_ref, tgt_ref, table_ref, logits_ref, loss_ref):
    """Embedding lookup fused with per-row cross-entropy (mean in wrapper)."""
    logits_f32 = _gather_logits(idx_ref[...], table_ref[...])
    logits_ref[...] = logits_f32.astype(logits_ref.dtype)

    g, v = logits_f32.shape
    # Numerically stable logsumexp (exp/log run on the EUP slot).
    m = jnp.max(logits_f32, axis=-1, keepdims=True)                   # (G, 1)
    lse = m + jnp.log(jnp.sum(jnp.exp(logits_f32 - m), axis=-1, keepdims=True))
    # Target logit via one-hot select (pure VPU, no MXU).
    col = jax.lax.broadcasted_iota(jnp.int32, (g, v), 1)
    tgt_oh = (col == tgt_ref[...]).astype(jnp.float32)                # (G, V)
    tgt_logit = jnp.sum(tgt_oh * logits_f32, axis=-1, keepdims=True)  # (G, 1)
    loss_ref[...] = lse - tgt_logit                                   # per-row NLL


def _pick_rows_per_tile(n_rows, v, table_itemsize, vmem_budget_bytes=6 << 20):
    """Largest G (multiple of 8, <= 512) whose per-step VMEM footprint fits.

    Budget covers 2x double-buffered (G, V) logits output blocks plus roughly
    two f32-wide (G, V) in-kernel temporaries (one-hot + f32 logits).  6 MiB
    leaves headroom under every chip's default scoped-VMEM limit (v5e 16 MiB,
    v6e/v7x 32 MiB) without needing vmem_limit_bytes.
    """
    bytes_per_row = v * (2 * table_itemsize + 2 * 4)
    g = vmem_budget_bytes // max(bytes_per_row, 1)
    g = min(512, int(g))
    n_pad8 = -(-n_rows // 8) * 8
    g = min(g, n_pad8)
    return max(8, (g // 8) * 8)


def bigram_forward(table, idx, target=None, *, rows_per_tile=None):
    """Forward pass of BigramLanguageModel.

      target is None -> (logits (B, T, V), None)
      target given   -> (logits (B*T, V), scalar mean cross-entropy loss)
    """
    B, T = idx.shape
    V, C = table.shape
    assert V == C, "bigram table must be square (tab_dim x tab_dim)"
    N = B * T

    out_dtype = table.dtype
    G = rows_per_tile or _pick_rows_per_tile(N, C, jnp.dtype(out_dtype).itemsize)
    n_tiles = -(-N // G)
    n_pad = n_tiles * G

    idx_col = jnp.pad(
        idx.reshape(-1).astype(jnp.int32), (0, n_pad - N)
    ).reshape(n_pad, 1)

    idx_spec = pl.BlockSpec((G, 1), lambda i: (i, 0))
    tgt_spec = pl.BlockSpec((G, 1), lambda i: (i, 0))
    # Constant index_map -> the table is DMA'd from HBM once and stays
    # VMEM-resident across all grid steps.
    table_spec = pl.BlockSpec((V, C), lambda i: (0, 0))
    logits_spec = pl.BlockSpec((G, C), lambda i: (i, 0))
    loss_spec = pl.BlockSpec((G, 1), lambda i: (i, 0))

    compiler_params = pltpu.CompilerParams(dimension_semantics=("parallel",))

    if target is None:
        logits_pad = pl.pallas_call(
            _embed_kernel,
            out_shape=jax.ShapeDtypeStruct((n_pad, C), out_dtype),
            grid_spec=pltpu.PrefetchScalarGridSpec(
                num_scalar_prefetch=0,
                grid=(n_tiles,),
                in_specs=[idx_spec, table_spec],
                out_specs=logits_spec,
            ),
            compiler_params=compiler_params,
        )(idx_col, table)
        return logits_pad[:N].reshape(B, T, C), None

    tgt_col = jnp.pad(
        target.reshape(-1).astype(jnp.int32), (0, n_pad - N)
    ).reshape(n_pad, 1)

    logits_pad, loss_rows = pl.pallas_call(
        _embed_ce_kernel,
        out_shape=(
            jax.ShapeDtypeStruct((n_pad, C), out_dtype),
            jax.ShapeDtypeStruct((n_pad, 1), jnp.float32),
        ),
        grid_spec=pltpu.PrefetchScalarGridSpec(
            num_scalar_prefetch=0,
            grid=(n_tiles,),
            in_specs=[idx_spec, tgt_spec, table_spec],
            out_specs=(logits_spec, loss_spec),
        ),
        compiler_params=compiler_params,
    )(idx_col, tgt_col, table)

    logits = logits_pad[:N]
    # Mean (1/N) folded into the wrapper reduce over valid rows only.
    loss = jnp.sum(loss_rows[:N, 0]) / N
    return logits, loss


if __name__ == "__main__":
    V = 128   # vocab size (tab_dim) — lane-aligned
    B, T = 2, 8

    key = jax.random.PRNGKey(0)
    k_tab, k_idx, k_tgt = jax.random.split(key, 3)

    # nn.Embedding default init ~ N(0, 1)
    table = jax.random.normal(k_tab, (V, V), dtype=jnp.float32)
    idx = jax.random.randint(k_idx, (B, T), 0, V, dtype=jnp.int32)
    target = jax.random.randint(k_tgt, (B, T), 0, V, dtype=jnp.int32)

    # target=None path
    logits_no_tgt, loss_none = bigram_forward(table, idx, target=None)
    jax.block_until_ready(logits_no_tgt)
    assert logits_no_tgt.shape == (B, T, V)
    assert loss_none is None

    # target path
    logits, loss = bigram_forward(table, idx, target=target)
    jax.block_until_ready((logits, loss))
    assert logits.shape == (B * T, V)

    # Pure-JAX reference check.
    ref_logits = table[idx.reshape(-1)]
    ref_lse = jax.scipy.special.logsumexp(ref_logits, axis=-1)
    ref_loss = jnp.mean(
        ref_lse - ref_logits[jnp.arange(B * T), target.reshape(-1)]
    )
    assert jnp.allclose(logits_no_tgt.reshape(B * T, V), ref_logits, atol=1e-5)
    assert jnp.allclose(logits, ref_logits, atol=1e-5)
    assert jnp.allclose(loss, ref_loss, atol=1e-5)

    print("KERNEL_OK")
</pallas_src>

<mosaic_0001>
module attributes {stable_mosaic.version = 11 : i64} {
  func.func @_embed_kernel(%arg0: i32, %arg1: memref<16x1xi32, #tpu.memory_space<vmem>>, %arg2: memref<128x128xf32, #tpu.memory_space<vmem>>, %arg3: memref<16x128xf32, #tpu.memory_space<vmem>>) attributes {dimension_semantics = [#tpu.dimension_semantics<parallel>], iteration_bounds = array<i64: 1>, scalar_prefetch = 0 : i64, scratch_operands = 0 : i64, tpu.core_type = #tpu.core_type<tc>, window_params = [{transform_indices = @transform_0, window_bounds = array<i64: 16, 1>}, {pipeline_mode = #tpu.pipeline_mode<synchronous>, transform_indices = @transform_1, window_bounds = array<i64: 128, 128>}, {transform_indices = @transform_2, window_bounds = array<i64: 16, 128>}]} {
    %c0 = arith.constant 0 : index
    %c0_0 = arith.constant 0 : index
    %0 = vector.load %arg1[%c0, %c0_0] : memref<16x1xi32, #tpu.memory_space<vmem>>, vector<16x1xi32>
    %c0_1 = arith.constant 0 : index
    %c0_2 = arith.constant 0 : index
    %1 = vector.load %arg2[%c0_1, %c0_2] : memref<128x128xf32, #tpu.memory_space<vmem>>, vector<128x128xf32>
    %2 = tpu.iota {dimensions = array<i32: 1>} : vector<16x128xi32>
    %3 = vector.broadcast %0 : vector<16x1xi32> to vector<16x128xi32>
    %4 = arith.cmpi eq, %2, %3 : vector<16x128xi32>
    %5 = arith.extui %4 : vector<16x128xi1> to vector<16x128xi32>
    %6 = arith.sitofp %5 : vector<16x128xi32> to vector<16x128xf32>
    %cst = arith.constant dense<0.000000e+00> : vector<16x128xf32>
    %7 = tpu.matmul %6, %1, %cst {dimension_numbers = #tpu.dot_dimension_numbers<[1], [0], [0], [1], [0, 0, 1, 1], [], []>, precision = #tpu.contract_precision<fp32>} : vector<16x128xf32>, vector<128x128xf32>, vector<16x128xf32> -> vector<16x128xf32>
    %c0_3 = arith.constant 0 : index
    %c0_4 = arith.constant 0 : index
    %8 = vector.load %arg3[%c0_3, %c0_4] : memref<16x128xf32, #tpu.memory_space<vmem>>, vector<16x128xf32>
    tpu.vector_store %arg3[%c0_3, %c0_4], %7 {strides = array<i32>} : memref<16x128xf32, #tpu.memory_space<vmem>>, vector<16x128xf32>,
    return
  }
  func.func @transform_0(%arg0: i32) -> (i32, i32) {
    %c0_i32 = arith.constant 0 : i32
    %c0_i32_0 = arith.constant 0 : i32
    return %arg0, %c0_i32 : i32, i32
  }
  func.func @transform_1(%arg0: i32) -> (i32, i32) {
    %c0_i32 = arith.constant 0 : i32
    %c0_i32_0 = arith.constant 0 : i32
    %c0_i32_1 = arith.constant 0 : i32
    return %c0_i32, %c0_i32_0 : i32, i32
  }
  func.func @transform_2(%arg0: i32) -> (i32, i32) {
    %c0_i32 = arith.constant 0 : i32
    %c0_i32_0 = arith.constant 0 : i32
    return %arg0, %c0_i32 : i32, i32
  }
}

</mosaic_0001>

<llo_original>
// kernel: tpu_custom_call.1
$region0: #{tpu_custom_call.1}
  #allocation0 [shape = 'u32[]', space=smem, size = 0x4, offset = 0x4, fixed_abs, tag = 'smem constant byte address 0x4 - core index']
  #allocation1 [shape = 'u32[72,128]{1,0:T(1,128)}', space=vmem, size = 0x9000, scoped, tag = 'internal scratch']
  %s0 = inlined_call_operand.vmem [shape: s32[16,1], index: 0, kind: input, shape index: {}]
  %s1 = inlined_call_operand.hbm [shape: f32[128,128], index: 1, kind: input, shape index: {}]
  %s2 = inlined_call_operand.hbm [shape: f32[16,128], index: 2, kind: output, shape index: {}]
  %s3 = sld [smem:[#allocation0]]
  $region22: #{tpu_custom_call.1} parent=0
    _
  %s5 = ssub.s32 1, %s3
  %s6 = scalar_select 0, %s5, %s3
  $region1: #{tpu_custom_call.1} parent=0
    #allocation2 [shape = 'u8[65536]{0}', space=vmem, size = 0x10000, scoped, tag = 'input window, operand 1, single buffered']
    #allocation3 [shape = 's32[1]{0}', space=sflag, size = 0x4, scoped, tag = 'scoped memory for tpu_custom_call.1']
    #allocation4 [shape = 's32[1]{0}', space=sflag, size = 0x4, scoped, tag = 'scoped memory for tpu_custom_call.1']
    #allocation5 [shape = 'u8[8192]{0}', space=vmem, size = 0x2000, scoped, tag = 'output window, operand 0, single buffered']
    %7 = vsyncpa [#allocation3], 0
    %8 = vsyncpa [#allocation4], 0
    // Predicated region
    $region2: #{tpu_custom_call.1} parent=1 // pred_check
      _
    $region3: #{tpu_custom_call.1} parent=1 // pred_check_branch
      %10 = sbr.rel (0) target = $region5
    $region4: #{tpu_custom_call.1} parent=1 // pred_region
      _
    $region5: #{tpu_custom_call.1} parent=1 // pred_fallthru
      _
    // Predicated region
    $region6: #{tpu_custom_call.1} parent=1 // pred_check
      _
    $region7: #{tpu_custom_call.1} parent=1 // pred_check_branch
      %12 = sbr.rel (0) target = $region9
    $region8: #{tpu_custom_call.1} parent=1 // pred_region
      %14 = vsyncadd [#allocation3], 0
      %s15 = sshll.u32 %s1, 4
      %s16 = int_to_ptr.hbm [resolvable:$true] %s15
      %s17 = sshll.u32 [#allocation2], 4
      %s18 = int_to_ptr.vmem [resolvable:$true] %s17
      %23 = dma.hbm_to_vmem [thread:$0]  %s16, 2048, %s18, [#allocation3], 128, 128, 8
    $region9: #{tpu_custom_call.1} parent=1 // pred_fallthru
      _
    // Predicated region
    $region10: #{tpu_custom_call.1} parent=1 // pred_check
      _
    $region11: #{tpu_custom_call.1} parent=1 // pred_check_branch
      %25 = sbr.rel (0) target = $region13
    $region12: #{tpu_custom_call.1} parent=1 // pred_region
      %27 = dma.done [#allocation3], 2048
    $region13: #{tpu_custom_call.1} parent=1 // pred_fallthru
      _
    %v28 = vld [vmem:[%s0] sm:$0xff]
    %v29 = vld [vmem:[%s0 + $0x8] sm:$0xff]
    %v30 = vld [vmem:[#allocation2] sm:$0xff]
    %v31 = vld [vmem:[#allocation2 + $0x8] sm:$0xff]
    %v32 = vld [vmem:[#allocation2 + $0x10] sm:$0xff]
    %v33 = vld [vmem:[#allocation2 + $0x18] sm:$0xff]
    %v34 = vld [vmem:[#allocation2 + $0x20] sm:$0xff]
    %v35 = vld [vmem:[#allocation2 + $0x28] sm:$0xff]
    %v36 = vld [vmem:[#allocation2 + $0x30] sm:$0xff]
    %v37 = vld [vmem:[#allocation2 + $0x38] sm:$0xff]
    %v38 = vld [vmem:[#allocation2 + $0x40] sm:$0xff]
    %v39 = vld [vmem:[#allocation2 + $0x48] sm:$0xff]
    %v40 = vld [vmem:[#allocation2 + $0x50] sm:$0xff]
    %v41 = vld [vmem:[#allocation2 + $0x58] sm:$0xff]
    %v42 = vld [vmem:[#allocation2 + $0x60] sm:$0xff]
    %v43 = vld [vmem:[#allocation2 + $0x68] sm:$0xff]
    %v44 = vld [vmem:[#allocation2 + $0x70] sm:$0xff]
    %v45 = vld [vmem:[#allocation2 + $0x78] sm:$0xff]
    %v46 = vlaneseq
    %v47 = vand.u32 %v46, 127
    %48 = vset.pattern.permute.xlu0 0
    %49 = vperm.xlu0 %48, %v28
    %v50 = vpop.permute.xlu0 %49
    %51 = vset.pattern.permute.xlu0 0
    %52 = vperm.xlu0 %51, %v29
    %v53 = vpop.permute.xlu0 %52
    %vm54 = vcmp.eq.s32.totalorder %v47, %v50
    %vm55 = vcmp.eq.s32.totalorder %v47, %v53
    %v56 = vsel %vm54, 1, 0
    %v57 = vsel %vm55, 1, 0
    %v58 = vcvt.s32.f32 %v56
    %v59 = vcvt.s32.f32 %v57
    %v60 = vand.u32 %v45, 4294901760
    %61 = vmatpush.msra.mxu0 %v60
    %v62 = vand.u32 %v44, 4294901760
    %63 = vmatpush.msra.mxu0 %v62
    %v64 = vand.u32 %v43, 4294901760
    %65 = vmatpush.msra.mxu0 %v64
    %v66 = vand.u32 %v42, 4294901760
    %67 = vmatpush.msra.mxu0 %v66
    %v68 = vand.u32 %v41, 4294901760
    %69 = vmatpush.msra.mxu0 %v68
    %v70 = vand.u32 %v40, 4294901760
    %71 = vmatpush.msra.mxu0 %v70
    %v72 = vand.u32 %v39, 4294901760
    %73 = vmatpush.msra.mxu0 %v72
    %v74 = vand.u32 %v38, 4294901760
    %75 = vmatpush.msra.mxu0 %v74
    %v76 = vand.u32 %v37, 4294901760
    %77 = vmatpush.msra.mxu0 %v76
    %v78 = vand.u32 %v36, 4294901760
    %79 = vmatpush.msra.mxu0 %v78
    %v80 = vand.u32 %v35, 4294901760
    %81 = vmatpush.msra.mxu0 %v80
    %v82 = vand.u32 %v34, 4294901760
    %83 = vmatpush.msra.mxu0 %v82
    %v84 = vand.u32 %v33, 4294901760
    %85 = vmatpush.msra.mxu0 %v84
    %v86 = vand.u32 %v32, 4294901760
    %87 = vmatpush.msra.mxu0 %v86
    %v88 = vand.u32 %v31, 4294901760
    %89 = vmatpush.msra.mxu0 %v88
    %v90 = vand.u32 %v30, 4294901760
    %91 = vmatpush.msra.mxu0 %v90
    %v92 = vand.u32 %v58, 4294901760
    %v93 = vsub.f32 %v58, %v92
    %v94 = vand.u32 %v93, 4294901760
    %v95 = vsub.f32 %v93, %v94
    %v96 = vand.u32 %v95, 4294901760
    %97 = vmatmul.f32.gmra.mxu0 %v96
    %v98 = vpop.f32.mrf.mxu0
    %v99 = vadd.f32 0.0, %v98
    %v100 = vand.u32 %v59, 4294901760
    %v101 = vsub.f32 %v59, %v100
    %v102 = vand.u32 %v101, 4294901760
    %v103 = vsub.f32 %v101, %v102
    %v104 = vand.u32 %v103, 4294901760
    %105 = vmatmul.f32.gmra.mxu0 %v104
    %v106 = vpop.f32.mrf.mxu0
    %v107 = vadd.f32 0.0, %v106
    %108 = vdwg.mxu0
    %v109 = vand.u32 %v45, 4294901760
    %v110 = vsub.f32 %v45, %v109
    %v111 = vand.u32 %v110, 4294901760
    %v112 = vsub.f32 %v110, %v111
    %v113 = vand.u32 %v112, 4294901760
    %114 = vmatpush.msra.mxu0 %v113
    %v115 = vand.u32 %v44, 4294901760
    %v116 = vsub.f32 %v44, %v115
    %v117 = vand.u32 %v116, 4294901760
    %v118 = vsub.f32 %v116, %v117
    %v119 = vand.u32 %v118, 4294901760
    %120 = vmatpush.msra.mxu0 %v119
    %v121 = vand.u32 %v43, 4294901760
    %v122 = vsub.f32 %v43, %v121
    %v123 = vand.u32 %v122, 4294901760
    %v124 = vsub.f32 %v122, %v123
    %v125 = vand.u32 %v124, 4294901760
    %126 = vmatpush.msra.mxu0 %v125
    %v127 = vand.u32 %v42, 4294901760
    %v128 = vsub.f32 %v42, %v127
    %v129 = vand.u32 %v128, 4294901760
    %v130 = vsub.f32 %v128, %v129
    %v131 = vand.u32 %v130, 4294901760
    %132 = vmatpush.msra.mxu0 %v131
    %v133 = vand.u32 %v41, 4294901760
    %v134 = vsub.f32 %v41, %v133
    %v135 = vand.u32 %v134, 4294901760
    %v136 = vsub.f32 %v134, %v135
    %v137 = vand.u32 %v136, 4294901760
    %138 = vmatpush.msra.mxu0 %v137
    %v139 = vand.u32 %v40, 4294901760
    %v140 = vsub.f32 %v40, %v139
    %v141 = vand.u32 %v140, 4294901760
    %v142 = vsub.f32 %v140, %v141
    %v143 = vand.u32 %v142, 4294901760
    %144 = vmatpush.msra.mxu0 %v143
    %v145 = vand.u32 %v39, 4294901760
    %v146 = vsub.f32 %v39, %v145
    %v147 = vand.u32 %v146, 4294901760
    %v148 = vsub.f32 %v146, %v147
    %v149 = vand.u32 %v148, 4294901760
    %150 = vmatpush.msra.mxu0 %v149
    %v151 = vand.u32 %v38, 4294901760
    %v152 = vsub.f32 %v38, %v151
    %v153 = vand.u32 %v152, 4294901760
    %v154 = vsub.f32 %v152, %v153
    %v155 = vand.u32 %v154, 4294901760
    %156 = vmatpush.msra.mxu0 %v155
    %v157 = vand.u32 %v37, 4294901760
    %v158 = vsub.f32 %v37, %v157
    %v159 = vand.u32 %v158, 4294901760
    %v160 = vsub.f32 %v158, %v159
    %v161 = vand.u32 %v160, 4294901760
    %162 = vmatpush.msra.mxu0 %v161
    %v163 = vand.u32 %v36, 4294901760
    %v164 = vsub.f32 %v36, %v163
    %v165 = vand.u32 %v164, 4294901760
    %v166 = vsub.f32 %v164, %v165
    %v167 = vand.u32 %v166, 4294901760
    %168 = vmatpush.msra.mxu0 %v167
    %v169 = vand.u32 %v35, 4294901760
    %v170 = vsub.f32 %v35, %v169
    %v171 = vand.u32 %v170, 4294901760
    %v172 = vsub.f32 %v170, %v171
    %v173 = vand.u32 %v172, 4294901760
    %174 = vmatpush.msra.mxu0 %v173
    %v175 = vand.u32 %v34, 4294901760
    %v176 = vsub.f32 %v34, %v175
    %v177 = vand.u32 %v176, 4294901760
    %v178 = vsub.f32 %v176, %v177
    %v179 = vand.u32 %v178, 4294901760
    %180 = vmatpush.msra.mxu0 %v179
    %v181 = vand.u32 %v33, 4294901760
    %v182 = vsub.f32 %v33, %v181
    %v183 = vand.u32 %v182, 4294901760
    %v184 = vsub.f32 %v182, %v183
    %v185 = vand.u32 %v184, 4294901760
    %186 = vmatpush.msra.mxu0 %v185
    %v187 = vand.u32 %v32, 4294901760
    %v188 = vsub.f32 %v32, %v187
    %v189 = vand.u32 %v188, 4294901760
    %v190 = vsub.f32 %v188, %v189
    %v191 = vand.u32 %v190, 4294901760
    %192 = vmatpush.msra.mxu0 %v191
    %v193 = vand.u32 %v31, 4294901760
    %v194 = vsub.f32 %v31, %v193
    %v195 = vand.u32 %v194, 4294901760
    %v196 = vsub.f32 %v194, %v195
    %v197 = vand.u32 %v196, 4294901760
    %198 = vmatpush.msra.mxu0 %v197
    %v199 = vand.u32 %v30, 4294901760
    %v200 = vsub.f32 %v30, %v199
    %v201 = vand.u32 %v200, 4294901760
    %v202 = vsub.f32 %v200, %v201
    %v203 = vand.u32 %v202, 4294901760
    %204 = vmatpush.msra.mxu0 %v203
    %v205 = vand.u32 %v58, 4294901760
    %206 = vmatmul.f32.gmra.mxu0 %v205
    %v207 = vpop.f32.mrf.mxu0
    %v208 = vadd.f32 %v99, %v207
    %v209 = vand.u32 %v59, 4294901760
    %210 = vmatmul.f32.gmra.mxu0 %v209
    %v211 = vpop.f32.mrf.mxu0
    %v212 = vadd.f32 %v107, %v211
    %213 = vdwg.mxu0
    %v214 = vand.u32 %v45, 4294901760
    %v215 = vsub.f32 %v45, %v214
    %216 = vmatpush.msra.mxu0 %v215
    %v217 = vand.u32 %v44, 4294901760
    %v218 = vsub.f32 %v44, %v217
    %219 = vmatpush.msra.mxu0 %v218
    %v220 = vand.u32 %v43, 4294901760
    %v221 = vsub.f32 %v43, %v220
    %222 = vmatpush.msra.mxu0 %v221
    %v223 = vand.u32 %v42, 4294901760
    %v224 = vsub.f32 %v42, %v223
    %225 = vmatpush.msra.mxu0 %v224
    %v226 = vand.u32 %v41, 4294901760
    %v227 = vsub.f32 %v41, %v226
    %228 = vmatpush.msra.mxu0 %v227
    %v229 = vand.u32 %v40, 4294901760
    %v230 = vsub.f32 %v40, %v229
    %231 = vmatpush.msra.mxu0 %v230
    %v232 = vand.u32 %v39, 4294901760
    %v233 = vsub.f32 %v39, %v232
    %234 = vmatpush.msra.mxu0 %v233
    %v235 = vand.u32 %v38, 4294901760
    %v236 = vsub.f32 %v38, %v235
    %237 = vmatpush.msra.mxu0 %v236
    %v238 = vand.u32 %v37, 4294901760
    %v239 = vsub.f32 %v37, %v238
    %240 = vmatpush.msra.mxu0 %v239
    %v241 = vand.u32 %v36, 4294901760
    %v242 = vsub.f32 %v36, %v241
    %243 = vmatpush.msra.mxu0 %v242
    %v244 = vand.u32 %v35, 4294901760
    %v245 = vsub.f32 %v35, %v244
    %246 = vmatpush.msra.mxu0 %v245
    %v247 = vand.u32 %v34, 4294901760
    %v248 = vsub.f32 %v34, %v247
    %249 = vmatpush.msra.mxu0 %v248
    %v250 = vand.u32 %v33, 4294901760
    %v251 = vsub.f32 %v33, %v250
    %252 = vmatpush.msra.mxu0 %v251
    %v253 = vand.u32 %v32, 4294901760
    %v254 = vsub.f32 %v32, %v253
    %255 = vmatpush.msra.mxu0 %v254
    %v256 = vand.u32 %v31, 4294901760
    %v257 = vsub.f32 %v31, %v256
    %258 = vmatpush.msra.mxu0 %v257
    %v259 = vand.u32 %v30, 4294901760
    %v260 = vsub.f32 %v30, %v259
    %261 = vmatpush.msra.mxu0 %v260
    %v262 = vand.u32 %v58, 4294901760
    %v263 = vsub.f32 %v58, %v262
    %264 = vmatmul.f32.gmra.mxu0 %v263
    %v265 = vpop.f32.mrf.mxu0
    %v266 = vadd.f32 %v208, %v265
    %v267 = vand.u32 %v59, 4294901760
    %v268 = vsub.f32 %v59, %v267
    %269 = vmatmul.f32.gmra.mxu0 %v268
    %v270 = vpop.f32.mrf.mxu0
    %v271 = vadd.f32 %v212, %v270
    %272 = vdwg.mxu0
    %v273 = vand.u32 %v45, 4294901760
    %274 = vmatpush.msra.mxu0 %v273
    %v275 = vand.u32 %v44, 4294901760
    %276 = vmatpush.msra.mxu0 %v275
    %v277 = vand.u32 %v43, 4294901760
    %278 = vmatpush.msra.mxu0 %v277
    %v279 = vand.u32 %v42, 4294901760
    %280 = vmatpush.msra.mxu0 %v279
    %v281 = vand.u32 %v41, 4294901760
    %282 = vmatpush.msra.mxu0 %v281
    %v283 = vand.u32 %v40, 4294901760
    %284 = vmatpush.msra.mxu0 %v283
    %v285 = vand.u32 %v39, 4294901760
    %286 = vmatpush.msra.mxu0 %v285
    %v287 = vand.u32 %v38, 4294901760
    %288 = vmatpush.msra.mxu0 %v287
    %v289 = vand.u32 %v37, 4294901760
    %290 = vmatpush.msra.mxu0 %v289
    %v291 = vand.u32 %v36, 4294901760
    %292 = vmatpush.msra.mxu0 %v291
    %v293 = vand.u32 %v35, 4294901760
    %294 = vmatpush.msra.mxu0 %v293
    %v295 = vand.u32 %v34, 4294901760
    %296 = vmatpush.msra.mxu0 %v295
    %v297 = vand.u32 %v33, 4294901760
    %298 = vmatpush.msra.mxu0 %v297
    %v299 = vand.u32 %v32, 4294901760
    %300 = vmatpush.msra.mxu0 %v299
    %v301 = vand.u32 %v31, 4294901760
    %302 = vmatpush.msra.mxu0 %v301
    %v303 = vand.u32 %v30, 4294901760
    %304 = vmatpush.msra.mxu0 %v303
    %v305 = vand.u32 %v58, 4294901760
    %v306 = vsub.f32 %v58, %v305
    %v307 = vand.u32 %v306, 4294901760
    %308 = vmatmul.f32.gmra.mxu0 %v307
    %v309 = vpop.f32.mrf.mxu0
    %v310 = vadd.f32 %v266, %v309
    %v311 = vand.u32 %v59, 4294901760
    %v312 = vsub.f32 %v59, %v311
    %v313 = vand.u32 %v312, 4294901760
    %314 = vmatmul.f32.gmra.mxu0 %v313
    %v315 = vpop.f32.mrf.mxu0
    %v316 = vadd.f32 %v271, %v315
    %317 = vdwg.mxu0
    %v318 = vand.u32 %v45, 4294901760
    %v319 = vsub.f32 %v45, %v318
    %v320 = vand.u32 %v319, 4294901760
    %321 = vmatpush.msra.mxu0 %v320
    %v322 = vand.u32 %v44, 4294901760
    %v323 = vsub.f32 %v44, %v322
    %v324 = vand.u32 %v323, 4294901760
    %325 = vmatpush.msra.mxu0 %v324
    %v326 = vand.u32 %v43, 4294901760
    %v327 = vsub.f32 %v43, %v326
    %v328 = vand.u32 %v327, 4294901760
    %329 = vmatpush.msra.mxu0 %v328
    %v330 = vand.u32 %v42, 4294901760
    %v331 = vsub.f32 %v42, %v330
    %v332 = vand.u32 %v331, 4294901760
    %333 = vmatpush.msra.mxu0 %v332
    %v334 = vand.u32 %v41, 4294901760
    %v335 = vsub.f32 %v41, %v334
    %v336 = vand.u32 %v335, 4294901760
    %337 = vmatpush.msra.mxu0 %v336
    %v338 = vand.u32 %v40, 4294901760
    %v339 = vsub.f32 %v40, %v338
    %v340 = vand.u32 %v339, 4294901760
    %341 = vmatpush.msra.mxu0 %v340
    %v342 = vand.u32 %v39, 4294901760
    %v343 = vsub.f32 %v39, %v342
    %v344 = vand.u32 %v343, 4294901760
    %345 = vmatpush.msra.mxu0 %v344
    %v346 = vand.u32 %v38, 4294901760
    %v347 = vsub.f32 %v38, %v346
    %v348 = vand.u32 %v347, 4294901760
    %349 = vmatpush.msra.mxu0 %v348
    %v350 = vand.u32 %v37, 4294901760
    %v351 = vsub.f32 %v37, %v350
    %v352 = vand.u32 %v351, 4294901760
    %353 = vmatpush.msra.mxu0 %v352
    %v354 = vand.u32 %v36, 4294901760
    %v355 = vsub.f32 %v36, %v354
    %v356 = vand.u32 %v355, 4294901760
    %357 = vmatpush.msra.mxu0 %v356
    %v358 = vand.u32 %v35, 4294901760
    %v359 = vsub.f32 %v35, %v358
    %v360 = vand.u32 %v359, 4294901760
    %361 = vmatpush.msra.mxu0 %v360
    %v362 = vand.u32 %v34, 4294901760
    %v363 = vsub.f32 %v34, %v362
    %v364 = vand.u32 %v363, 4294901760
    %365 = vmatpush.msra.mxu0 %v364
    %v366 = vand.u32 %v33, 4294901760
    %v367 = vsub.f32 %v33, %v366
    %v368 = vand.u32 %v367, 4294901760
    %369 = vmatpush.msra.mxu0 %v368
    %v370 = vand.u32 %v32, 4294901760
    %v371 = vsub.f32 %v32, %v370
    %v372 = vand.u32 %v371, 4294901760
    %373 = vmatpush.msra.mxu0 %v372
    %v374 = vand.u32 %v31, 4294901760
    %v375 = vsub.f32 %v31, %v374
    %v376 = vand.u32 %v375, 4294901760
    %377 = vmatpush.msra.mxu0 %v376
    %v378 = vand.u32 %v30, 4294901760
    %v379 = vsub.f32 %v30, %v378
    %v380 = vand.u32 %v379, 4294901760
    %381 = vmatpush.msra.mxu0 %v380
    %v382 = vand.u32 %v58, 4294901760
    %383 = vmatmul.f32.gmra.mxu0 %v382
    %v384 = vpop.f32.mrf.mxu0
    %v385 = vadd.f32 %v310, %v384
    %v386 = vand.u32 %v59, 4294901760
    %387 = vmatmul.f32.gmra.mxu0 %v386
    %v388 = vpop.f32.mrf.mxu0
    %v389 = vadd.f32 %v316, %v388
    %390 = vdwg.mxu0
    %v391 = vand.u32 %v45, 4294901760
    %392 = vmatpush.msra.mxu0 %v391
    %v393 = vand.u32 %v44, 4294901760
    %394 = vmatpush.msra.mxu0 %v393
    %v395 = vand.u32 %v43, 4294901760
    %396 = vmatpush.msra.mxu0 %v395
    %v397 = vand.u32 %v42, 4294901760
    %398 = vmatpush.msra.mxu0 %v397
    %v399 = vand.u32 %v41, 4294901760
    %400 = vmatpush.msra.mxu0 %v399
    %v401 = vand.u32 %v40, 4294901760
    %402 = vmatpush.msra.mxu0 %v401
    %v403 = vand.u32 %v39, 4294901760
    %404 = vmatpush.msra.mxu0 %v403
    %v405 = vand.u32 %v38, 4294901760
    %406 = vmatpush.msra.mxu0 %v405
    %v407 = vand.u32 %v37, 4294901760
    %408 = vmatpush.msra.mxu0 %v407
    %v409 = vand.u32 %v36, 4294901760
    %410 = vmatpush.msra.mxu0 %v409
    %v411 = vand.u32 %v35, 4294901760
    %412 = vmatpush.msra.mxu0 %v411
    %v413 = vand.u32 %v34, 4294901760
    %414 = vmatpush.msra.mxu0 %v413
    %v415 = vand.u32 %v33, 4294901760
    %416 = vmatpush.msra.mxu0 %v415
    %v417 = vand.u32 %v32, 4294901760
    %418 = vmatpush.msra.mxu0 %v417
    %v419 = vand.u32 %v31, 4294901760
    %420 = vmatpush.msra.mxu0 %v419
    %v421 = vand.u32 %v30, 4294901760
    %422 = vmatpush.msra.mxu0 %v421
    %v423 = vand.u32 %v58, 4294901760
    %424 = vmatmul.f32.gmra.mxu0 %v423
    %v425 = vpop.f32.mrf.mxu0
    %v426 = vadd.f32 %v385, %v425
    %v427 = vand.u32 %v59, 4294901760
    %428 = vmatmul.f32.gmra.mxu0 %v427
    %v429 = vpop.f32.mrf.mxu0
    %v430 = vadd.f32 %v389, %v429
    %431 = vdwg.mxu0
    %432 = vst [vmem:[#allocation5] sm:$0xff] %v426
    %433 = vst [vmem:[#allocation5 + $0x8] sm:$0xff] %v430
    // Predicated region
    $region14: #{tpu_custom_call.1} parent=1 // pred_check
      _
    $region15: #{tpu_custom_call.1} parent=1 // pred_check_branch
      %435 = sbr.rel (0) target = $region17
    $region16: #{tpu_custom_call.1} parent=1 // pred_region
      %437 = vsyncadd [#allocation4], 0
      %s438 = sshll.u32 [#allocation5], 4
      %s439 = int_to_ptr.vmem [resolvable:$true] %s438
      %s440 = sshll.u32 %s2, 4
      %s441 = int_to_ptr.hbm [resolvable:$true] %s440
      %446 = dma.vmem_to_hbm [thread:$0]  %s439, 256, %s441, [#allocation4], 128, 128, 8
    $region17: #{tpu_custom_call.1} parent=1 // pred_fallthru
      _
    // Predicated region
    $region18: #{tpu_custom_call.1} parent=1 // pred_check
      _
    $region19: #{tpu_custom_call.1} parent=1 // pred_check_branch
      %448 = sbr.rel (0) target = $region21
    $region20: #{tpu_custom_call.1} parent=1 // pred_region
      %450 = dma.done [#allocation4], 256
    $region21: #{tpu_custom_call.1} parent=1 // pred_fallthru
      _
    %451 = vsyncpa [#allocation3], 1
    %452 = vsyncpa [#allocation4], 1

</llo_original>
